<compile_context>
chip_gen: v7x
topology: tpu7x:2x2x1
jax: 0.10.0
libtpu: 0.0.40
codegen_flags: <defaults>
</compile_context>

<pallas_src>
import functools

import numpy as np
import jax
import jax.numpy as jnp
from jax.experimental import pallas as pl
from jax.experimental.pallas import tpu as pltpu


def _round_up(v, m):
    return (v + m - 1) // m * m


def _adaptive_spectral_kernel(scalars_ref,   # SMEM (2,)   [threshold, smooth]
                              x_ref,         # VMEM (R, Lp)   rows, matmul dtype
                              a_ref,         # VMEM (Lp, Lp)  folded operator  (w)
                              ah_ref,        # VMEM (Lp, Lp)  folded operator  (w_high)
                              pv_ref,        # VMEM (2, Lp)   Parseval vectors (DC, Nyquist)
                              same_ref,      # VMEM (R, R) f32  same-batch mask
                              tielt_ref,     # VMEM (R, R) f32  same-batch & (i<j) mask
                              o_ref,         # VMEM (R, Lp)
                              *, k_med, has_nyq):
    threshold = scalars_ref[0]
    smooth = scalars_ref[1]

    x = x_ref[...]                                   # (R, Lp)  bf16/f32 MXU operand
    xf = x.astype(jnp.float32)                       # f32 for energy / mask math

    # ---- per-row one-sided spectral energy via Parseval (ortho rfft) --------
    e = jnp.sum(xf * xf, axis=-1, keepdims=True)
    d0 = jnp.sum(xf * pv_ref[0:1, :], axis=-1, keepdims=True)   # X_0
    e = e + d0 * d0
    if has_nyq:
        d1 = jnp.sum(xf * pv_ref[1:2, :], axis=-1, keepdims=True)  # X_{L/2}
        e = e + d1 * d1
    e = 0.5 * e                                      # (R, 1)

    # ---- per-batch lower median (torch convention) via stable rank ----------
    # rank_j = #{i in batch(j): e_i < e_j} + #{i in batch(j), i<j: e_i == e_j}
    e_row = jnp.transpose(e)                         # (1, R)   XLU transpose
    lt = (e < e_row).astype(jnp.float32)             # lt[i, j] = e_i < e_j
    eq = (e == e_row).astype(jnp.float32)
    rank = jnp.sum(same_ref[...] * lt + tielt_ref[...] * eq,
                   axis=0, keepdims=True)            # (1, R)
    sel = (rank == float(k_med)).astype(jnp.float32)  # exactly one row per batch
    med = jnp.sum(same_ref[...] * (sel * e_row),
                  axis=-1, keepdims=True)            # (R, 1) median energy of own batch

    mask = jax.nn.sigmoid((e / (med + 1e-6) - threshold) * smooth)   # (R, 1) f32

    # ---- folded spectral operators:  out = x@A + mask * (x@A_high) ----------
    y = jnp.dot(x, a_ref[...], preferred_element_type=jnp.float32)    # (R, Lp)
    yh = jnp.dot(x, ah_ref[...], preferred_element_type=jnp.float32)  # (R, Lp)
    o_ref[...] = (y + mask * yh).astype(o_ref.dtype)


def adaptive_spectral_block(x, complex_weight, complex_weight_high, threshold, smooth,
                            *, matmul_dtype=jnp.bfloat16, rows_per_step=256):
    """x: (B, N, L) real array.  Returns (B, N, L) in x.dtype.

    matmul_dtype=bf16 feeds the MXU at peak (f32 accumulation); use jnp.float32
    for bit-for-bit precision.  rows_per_step: ~256 (v6e/v7x default), 512 is a
    good choice on v6e for moderate L, 128 on v5e.
    """
    B, N, L = x.shape
    Fk = L // 2 + 1
    Lp = _round_up(L, 128)

    # ---- fold w / w_high into real (L, L) spectral operators (done once) ----
    n = np.arange(L, dtype=np.float64)[:, None]
    k = np.arange(Fk, dtype=np.float64)[None, :]
    ang = 2.0 * np.pi * n * k / L                                   # (L, F)
    scale = 1.0 / np.sqrt(L)
    C = jnp.asarray(np.cos(ang) * scale, jnp.float32)               # fwd cos
    S = jnp.asarray(np.sin(ang) * scale, jnp.float32)               # fwd sin
    c = np.full((Fk, 1), 2.0)
    c[0, 0] = 1.0
    if L % 2 == 0:
        c[-1, 0] = 1.0
    Ci = jnp.asarray(c * np.cos(ang.T) * scale, jnp.float32)        # (F, L) inverse
    Si = jnp.asarray(c * np.sin(ang.T) * scale, jnp.float32)
    # (DC / Nyquist sin terms vanish, reproducing torch.fft.irfft's discard of
    #  their imaginary parts.)

    def fold(w):
        wr, wi = w[:, 0], w[:, 1]
        # x @ A  ==  irfft( rfft(x, 'ortho') * (wr + i*wi), 'ortho')
        return (C * wr + S * wi) @ Ci - (C * wi - S * wr) @ Si      # (L, L)

    A = fold(complex_weight.astype(jnp.float32))
    Ah = fold(complex_weight_high.astype(jnp.float32))
    if Lp > L:
        A = jnp.pad(A, ((0, Lp - L), (0, Lp - L)))
        Ah = jnp.pad(Ah, ((0, Lp - L), (0, Lp - L)))
    A = A.astype(matmul_dtype)
    Ah = Ah.astype(matmul_dtype)

    # Parseval correction vectors (ortho-normalized DC / Nyquist rows).
    has_nyq = (L % 2 == 0)
    pv = np.zeros((2, Lp), np.float32)
    pv[0, :L] = scale
    if has_nyq:
        pv[1, :L] = scale * ((-1.0) ** np.arange(L))
    pv = jnp.asarray(pv)

    # ---- batch tiling: bt batches (>=rows_per_step rows when possible) ------
    bt = max(1, min(B, rows_per_step // max(N, 1)))
    split_bt = (B + 1) // 2
    if split_bt < bt and split_bt * N >= 256:
        bt = split_bt           # dual-TC split only if each step still fills the MXU
    grid = -(-B // bt)
    bt = -(-B // grid)          # rebalance so whole-batch padding stays < bt
    Bp = bt * grid
    Rt = _round_up(bt * N, 8)   # rows per tile; extras are sentinel-batch pad rows

    # ---- lay out rows: (grid * Rt, Lp), pads only when required -------------
    xr = jnp.reshape(x, (B * N, L))
    if Bp > B:
        xr = jnp.pad(xr, ((0, (Bp - B) * N), (0, 0)))
    if Rt > bt * N:
        xr = jnp.pad(xr.reshape(grid, bt * N, L),
                     ((0, 0), (0, Rt - bt * N), (0, 0))).reshape(grid * Rt, L)
    if Lp > L:
        xr = jnp.pad(xr, ((0, 0), (0, Lp - L)))
    x2 = xr.astype(matmul_dtype)

    # ---- compile-time median masks (hoisted out of the kernel) --------------
    bid = np.full((Rt,), bt, np.int32)              # sentinel batch for pad rows
    bid[:bt * N] = np.arange(bt * N) // N
    same_np = (bid[:, None] == bid[None, :]).astype(np.float32)
    ridx = np.arange(Rt)
    tielt_np = same_np * (ridx[:, None] < ridx[None, :]).astype(np.float32)
    same = jnp.asarray(same_np)
    tielt = jnp.asarray(tielt_np)

    scalars = jnp.stack([jnp.asarray(threshold, jnp.float32).reshape(()),
                         jnp.asarray(smooth, jnp.float32).reshape(())])

    # ---- VMEM budget: physical capacity minus headroom -----------------------
    mb = jnp.dtype(matmul_dtype).itemsize
    ob = jnp.dtype(x.dtype).itemsize
    est = (2 * Lp * Lp * mb            # A, A_high (single-buffered)
           + 2 * Rt * Rt * 4           # median masks (single-buffered)
           + 2 * Lp * 4                # Parseval vectors
           + 2 * Rt * Lp * mb          # x tile, double-buffered
           + 2 * Rt * Lp * ob          # out tile, double-buffered
           + 6 * Rt * Lp * 4           # f32 intermediates (xf, y, yh, temps)
           + 8 * Rt * Rt * 4           # median temporaries
           + (4 << 20))
    try:
        phys_vmem = pltpu.get_tpu_info().vmem_capacity_bytes
    except Exception:
        phys_vmem = 64 << 20           # conservative (v7x-sized) fallback
    vmem_limit = int(min(int(phys_vmem * 0.85), max(32 << 20, est)))

    cost = pl.CostEstimate(
        flops=2 * 2 * grid * Rt * Lp * Lp,           # two (Rt,Lp)x(Lp,Lp) matmuls/step
        transcendentals=grid * Rt,                   # sigmoid per row
        bytes_accessed=(grid * Rt * Lp * (mb + ob)
                        + 2 * Lp * Lp * mb + 2 * Rt * Rt * 4 + 2 * Lp * 4))

    kernel = functools.partial(_adaptive_spectral_kernel,
                               k_med=(N - 1) // 2, has_nyq=has_nyq)
    single = dict(pipeline_mode=pl.Buffered(1))      # constant-index operands

    out2 = pl.pallas_call(
        kernel,
        out_shape=jax.ShapeDtypeStruct((grid * Rt, Lp), x.dtype),
        grid_spec=pltpu.PrefetchScalarGridSpec(
            num_scalar_prefetch=0,
            grid=(grid,),
            in_specs=[
                pl.BlockSpec(memory_space=pltpu.MemorySpace.SMEM),          # scalars
                pl.BlockSpec((Rt, Lp), lambda i: (i, 0)),                   # x rows
                pl.BlockSpec((Lp, Lp), lambda i: (0, 0), **single),         # A
                pl.BlockSpec((Lp, Lp), lambda i: (0, 0), **single),         # A_high
                pl.BlockSpec((2, Lp), lambda i: (0, 0), **single),          # Parseval
                pl.BlockSpec((Rt, Rt), lambda i: (0, 0), **single),         # same mask
                pl.BlockSpec((Rt, Rt), lambda i: (0, 0), **single),         # tie mask
            ],
            out_specs=pl.BlockSpec((Rt, Lp), lambda i: (i, 0)),
        ),
        compiler_params=pltpu.CompilerParams(
            dimension_semantics=("parallel",),
            vmem_limit_bytes=vmem_limit),
        cost_estimate=cost,
    )(scalars, x2, A, Ah, pv, same, tielt)

    # ---- undo padding (only when it was applied) -----------------------------
    o = out2
    if Rt > bt * N:
        o = o.reshape(grid, Rt, Lp)[:, :bt * N, :].reshape(grid * bt * N, Lp)
    if Bp > B or Lp > L:
        o = o[:B * N, :L]
    return o.reshape(B, N, L)


def reference(x, cw, cwh, threshold, smooth):
    """Pure-JAX reference reproducing the torch forward semantics."""
    B, N, L = x.shape
    xf = jnp.fft.rfft(x.astype(jnp.float32), axis=-1, norm='ortho')       # (B, N, F)
    w = cw[:, 0] + 1j * cw[:, 1]
    wh = cwh[:, 0] + 1j * cwh[:, 1]
    energy = jnp.sum(jnp.abs(xf) ** 2, axis=-1)                           # (B, N)
    med = jnp.sort(energy, axis=-1)[..., (N - 1) // 2][..., None]         # torch lower-median
    norm = energy / (med + 1e-6)
    mask = jax.nn.sigmoid((norm - threshold) * smooth)[..., None]
    xw = xf * w + (xf * mask) * wh
    # torch.fft.irfft ignores imaginary parts of DC / Nyquist bins
    xw = xw.at[..., 0].set(jnp.real(xw[..., 0]).astype(xw.dtype))
    if L % 2 == 0:
        xw = xw.at[..., -1].set(jnp.real(xw[..., -1]).astype(xw.dtype))
    out = jnp.fft.irfft(xw, n=L, axis=-1, norm='ortho')
    return out.astype(x.dtype)


if __name__ == "__main__":
    B, N, L = 2, 8, 16
    Fk = L // 2 + 1

    key = jax.random.PRNGKey(0)
    kx, kw, kwh, kt, ks = jax.random.split(key, 5)
    x = jax.random.normal(kx, (B, N, L), dtype=jnp.float32)
    # deterministic parameter init (shapes from the module's __init__)
    complex_weight = jax.random.normal(kw, (Fk, 2), dtype=jnp.float32) * 0.02
    complex_weight_high = jax.random.normal(kwh, (Fk, 2), dtype=jnp.float32) * 0.02
    threshold = jax.random.uniform(kt, (1,), dtype=jnp.float32)[0]
    smooth = jax.random.uniform(ks, (1,), dtype=jnp.float32)[0]

    fn = jax.jit(adaptive_spectral_block)
    out = fn(x, complex_weight, complex_weight_high, threshold, smooth)
    out = jax.block_until_ready(out)

    ref = reference(x, complex_weight, complex_weight_high, threshold, smooth)
    err = float(jnp.max(jnp.abs(out - ref)))
    # bf16 MXU operands (f32 accumulation): tolerance sized for the bf16 path.
    assert err < 2e-3, f"max abs error vs reference: {err}"
    print("KERNEL_OK")
</pallas_src>

<mosaic_0001>
module attributes {stable_mosaic.version = 11 : i64} {
  func.func @_adaptive_spectral_kernel(%arg0: i32, %arg1: memref<2xf32, #tpu.memory_space<smem>>, %arg2: memref<16x128xbf16, #tpu.memory_space<vmem>>, %arg3: memref<128x128xbf16, #tpu.memory_space<vmem>>, %arg4: memref<128x128xbf16, #tpu.memory_space<vmem>>, %arg5: memref<2x128xf32, #tpu.memory_space<vmem>>, %arg6: memref<16x16xf32, #tpu.memory_space<vmem>>, %arg7: memref<16x16xf32, #tpu.memory_space<vmem>>, %arg8: memref<16x128xf32, #tpu.memory_space<vmem>>) attributes {dimension_semantics = [#tpu.dimension_semantics<parallel>], iteration_bounds = array<i64: 1>, scalar_prefetch = 0 : i64, scratch_operands = 0 : i64, tpu.core_type = #tpu.core_type<tc>, window_params = [{transform_indices = @transform_0, window_bounds = array<i64: 2>}, {transform_indices = @transform_1, window_bounds = array<i64: 16, 128>}, {pipeline_mode = #tpu.pipeline_mode<synchronous>, transform_indices = @transform_2, window_bounds = array<i64: 128, 128>}, {pipeline_mode = #tpu.pipeline_mode<synchronous>, transform_indices = @transform_3, window_bounds = array<i64: 128, 128>}, {pipeline_mode = #tpu.pipeline_mode<synchronous>, transform_indices = @transform_4, window_bounds = array<i64: 2, 128>}, {pipeline_mode = #tpu.pipeline_mode<synchronous>, transform_indices = @transform_5, window_bounds = array<i64: 16, 16>}, {pipeline_mode = #tpu.pipeline_mode<synchronous>, transform_indices = @transform_6, window_bounds = array<i64: 16, 16>}, {transform_indices = @transform_7, window_bounds = array<i64: 16, 128>}]} {
    %c0 = arith.constant 0 : index
    %0 = memref.load %arg1[%c0] : memref<2xf32, #tpu.memory_space<smem>>
    %c1 = arith.constant 1 : index
    %1 = memref.load %arg1[%c1] : memref<2xf32, #tpu.memory_space<smem>>
    %c0_0 = arith.constant 0 : index
    %c0_1 = arith.constant 0 : index
    %2 = vector.load %arg2[%c0_0, %c0_1] : memref<16x128xbf16, #tpu.memory_space<vmem>>, vector<16x128xbf16>
    %3 = arith.extf %2 : vector<16x128xbf16> to vector<16x128xf32>
    %4 = arith.mulf %3, %3 : vector<16x128xf32>
    %cst = arith.constant dense<0.000000e+00> : vector<16xf32>
    %5 = vector.multi_reduction <add>, %4, %cst [1] : vector<16x128xf32> to vector<16xf32>
    %6 = vector.shape_cast %5 : vector<16xf32> to vector<16x1xf32>
    %c0_2 = arith.constant 0 : index
    %c0_3 = arith.constant 0 : index
    %7 = vector.load %arg5[%c0_2, %c0_3] : memref<2x128xf32, #tpu.memory_space<vmem>>, vector<1x128xf32>
    %8 = vector.broadcast %7 : vector<1x128xf32> to vector<16x128xf32>
    %9 = arith.mulf %3, %8 : vector<16x128xf32>
    %cst_4 = arith.constant dense<0.000000e+00> : vector<16xf32>
    %10 = vector.multi_reduction <add>, %9, %cst_4 [1] : vector<16x128xf32> to vector<16xf32>
    %11 = vector.shape_cast %10 : vector<16xf32> to vector<16x1xf32>
    %12 = arith.mulf %11, %11 : vector<16x1xf32>
    %13 = arith.addf %6, %12 : vector<16x1xf32>
    %c1_5 = arith.constant 1 : index
    %c0_6 = arith.constant 0 : index
    %14 = vector.load %arg5[%c1_5, %c0_6] : memref<2x128xf32, #tpu.memory_space<vmem>>, vector<1x128xf32>
    %15 = vector.broadcast %14 : vector<1x128xf32> to vector<16x128xf32>
    %16 = arith.mulf %3, %15 : vector<16x128xf32>
    %cst_7 = arith.constant dense<0.000000e+00> : vector<16xf32>
    %17 = vector.multi_reduction <add>, %16, %cst_7 [1] : vector<16x128xf32> to vector<16xf32>
    %18 = vector.shape_cast %17 : vector<16xf32> to vector<16x1xf32>
    %19 = arith.mulf %18, %18 : vector<16x1xf32>
    %20 = arith.addf %13, %19 : vector<16x1xf32>
    %cst_8 = arith.constant 5.000000e-01 : f32
    %21 = vector.broadcast %cst_8 : f32 to vector<16x1xf32>
    %22 = arith.mulf %21, %20 : vector<16x1xf32>
    %23 = tpu.transpose %22, [1, 0] : vector<16x1xf32> -> vector<1x16xf32>
    %24 = vector.broadcast %22 : vector<16x1xf32> to vector<16x16xf32>
    %25 = vector.broadcast %23 : vector<1x16xf32> to vector<16x16xf32>
    %26 = arith.cmpf olt, %24, %25 : vector<16x16xf32>
    %27 = arith.extui %26 : vector<16x16xi1> to vector<16x16xi32>
    %28 = arith.sitofp %27 : vector<16x16xi32> to vector<16x16xf32>
    %29 = vector.broadcast %22 : vector<16x1xf32> to vector<16x16xf32>
    %30 = vector.broadcast %23 : vector<1x16xf32> to vector<16x16xf32>
    %31 = arith.cmpf oeq, %29, %30 : vector<16x16xf32>
    %32 = arith.extui %31 : vector<16x16xi1> to vector<16x16xi32>
    %33 = arith.sitofp %32 : vector<16x16xi32> to vector<16x16xf32>
    %c0_9 = arith.constant 0 : index
    %c0_10 = arith.constant 0 : index
    %34 = vector.load %arg6[%c0_9, %c0_10] : memref<16x16xf32, #tpu.memory_space<vmem>>, vector<16x16xf32>
    %35 = arith.mulf %34, %28 : vector<16x16xf32>
    %c0_11 = arith.constant 0 : index
    %c0_12 = arith.constant 0 : index
    %36 = vector.load %arg7[%c0_11, %c0_12] : memref<16x16xf32, #tpu.memory_space<vmem>>, vector<16x16xf32>
    %37 = arith.mulf %36, %33 : vector<16x16xf32>
    %38 = arith.addf %35, %37 : vector<16x16xf32>
    %cst_13 = arith.constant dense<0.000000e+00> : vector<16xf32>
    %39 = vector.multi_reduction <add>, %38, %cst_13 [0] : vector<16x16xf32> to vector<16xf32>
    %40 = vector.shape_cast %39 : vector<16xf32> to vector<1x16xf32>
    %cst_14 = arith.constant 3.000000e+00 : f32
    %41 = vector.broadcast %cst_14 : f32 to vector<1x16xf32>
    %42 = arith.cmpf oeq, %40, %41 : vector<1x16xf32>
    %43 = arith.extui %42 : vector<1x16xi1> to vector<1x16xi32>
    %44 = arith.sitofp %43 : vector<1x16xi32> to vector<1x16xf32>
    %c0_15 = arith.constant 0 : index
    %c0_16 = arith.constant 0 : index
    %45 = vector.load %arg6[%c0_15, %c0_16] : memref<16x16xf32, #tpu.memory_space<vmem>>, vector<16x16xf32>
    %46 = arith.mulf %44, %23 : vector<1x16xf32>
    %47 = vector.broadcast %46 : vector<1x16xf32> to vector<16x16xf32>
    %48 = arith.mulf %45, %47 : vector<16x16xf32>
    %cst_17 = arith.constant dense<0.000000e+00> : vector<16xf32>
    %49 = vector.multi_reduction <add>, %48, %cst_17 [1] : vector<16x16xf32> to vector<16xf32>
    %50 = vector.shape_cast %49 : vector<16xf32> to vector<16x1xf32>
    %cst_18 = arith.constant 9.99999997E-7 : f32
    %51 = vector.broadcast %cst_18 : f32 to vector<16x1xf32>
    %52 = arith.addf %50, %51 : vector<16x1xf32>
    %53 = arith.divf %22, %52 : vector<16x1xf32>
    %54 = vector.broadcast %0 : f32 to vector<16x1xf32>
    %55 = arith.subf %53, %54 : vector<16x1xf32>
    %56 = vector.broadcast %1 : f32 to vector<16x1xf32>
    %57 = arith.mulf %55, %56 : vector<16x1xf32>
    %58 = arith.negf %57 : vector<16x1xf32>
    %59 = math.exp %58 : vector<16x1xf32>
    %cst_19 = arith.constant 1.000000e+00 : f32
    %60 = vector.broadcast %cst_19 : f32 to vector<16x1xf32>
    %61 = arith.addf %60, %59 : vector<16x1xf32>
    %62 = arith.divf %60, %61 : vector<16x1xf32>
    %c0_20 = arith.constant 0 : index
    %c0_21 = arith.constant 0 : index
    %63 = vector.load %arg3[%c0_20, %c0_21] : memref<128x128xbf16, #tpu.memory_space<vmem>>, vector<128x128xbf16>
    %cst_22 = arith.constant dense<0.000000e+00> : vector<16x128xf32>
    %64 = tpu.matmul %2, %63, %cst_22 {dimension_numbers = #tpu.dot_dimension_numbers<[1], [0], [0], [1], [0, 0, 1, 1], [], []>} : vector<16x128xbf16>, vector<128x128xbf16>, vector<16x128xf32> -> vector<16x128xf32>
    %c0_23 = arith.constant 0 : index
    %c0_24 = arith.constant 0 : index
    %65 = vector.load %arg4[%c0_23, %c0_24] : memref<128x128xbf16, #tpu.memory_space<vmem>>, vector<128x128xbf16>
    %cst_25 = arith.constant dense<0.000000e+00> : vector<16x128xf32>
    %66 = tpu.matmul %2, %65, %cst_25 {dimension_numbers = #tpu.dot_dimension_numbers<[1], [0], [0], [1], [0, 0, 1, 1], [], []>} : vector<16x128xbf16>, vector<128x128xbf16>, vector<16x128xf32> -> vector<16x128xf32>
    %67 = vector.broadcast %62 : vector<16x1xf32> to vector<16x128xf32>
    %68 = arith.mulf %67, %66 : vector<16x128xf32>
    %69 = arith.addf %64, %68 : vector<16x128xf32>
    %c0_26 = arith.constant 0 : index
    %c0_27 = arith.constant 0 : index
    %70 = vector.load %arg8[%c0_26, %c0_27] : memref<16x128xf32, #tpu.memory_space<vmem>>, vector<16x128xf32>
    tpu.vector_store %arg8[%c0_26, %c0_27], %69 {strides = array<i32>} : memref<16x128xf32, #tpu.memory_space<vmem>>, vector<16x128xf32>,
    return
  }
  func.func @transform_0(%arg0: i32) -> i32 {
    %c0_i32 = arith.constant 0 : i32
    %c0_i32_0 = arith.constant 0 : i32
    return %c0_i32 : i32
  }
  func.func @transform_1(%arg0: i32) -> (i32, i32) {
    %c0_i32 = arith.constant 0 : i32
    %c0_i32_0 = arith.constant 0 : i32
    return %arg0, %c0_i32 : i32, i32
  }
  func.func @transform_2(%arg0: i32) -> (i32, i32) {
    %c0_i32 = arith.constant 0 : i32
    %c0_i32_0 = arith.constant 0 : i32
    %c0_i32_1 = arith.constant 0 : i32
    return %c0_i32, %c0_i32_0 : i32, i32
  }
  func.func @transform_3(%arg0: i32) -> (i32, i32) {
    %c0_i32 = arith.constant 0 : i32
    %c0_i32_0 = arith.constant 0 : i32
    %c0_i32_1 = arith.constant 0 : i32
    return %c0_i32, %c0_i32_0 : i32, i32
  }
  func.func @transform_4(%arg0: i32) -> (i32, i32) {
    %c0_i32 = arith.constant 0 : i32
    %c0_i32_0 = arith.constant 0 : i32
    %c0_i32_1 = arith.constant 0 : i32
    return %c0_i32, %c0_i32_0 : i32, i32
  }
  func.func @transform_5(%arg0: i32) -> (i32, i32) {
    %c0_i32 = arith.constant 0 : i32
    %c0_i32_0 = arith.constant 0 : i32
    %c0_i32_1 = arith.constant 0 : i32
    return %c0_i32, %c0_i32_0 : i32, i32
  }
  func.func @transform_6(%arg0: i32) -> (i32, i32) {
    %c0_i32 = arith.constant 0 : i32
    %c0_i32_0 = arith.constant 0 : i32
    %c0_i32_1 = arith.constant 0 : i32
    return %c0_i32, %c0_i32_0 : i32, i32
  }
  func.func @transform_7(%arg0: i32) -> (i32, i32) {
    %c0_i32 = arith.constant 0 : i32
    %c0_i32_0 = arith.constant 0 : i32
    return %arg0, %c0_i32 : i32, i32
  }
}

</mosaic_0001>

<llo_original>
// kernel: adaptive_spectral_block.1
$region0: #{adaptive_spectral_block.1}
  #allocation0 [shape = 'u32[]', space=smem, size = 0x4, offset = 0x4, fixed_abs, tag = 'smem constant byte address 0x4 - core index']
  #allocation1 [shape = 'u32[144,128]{1,0:T(1,128)}', space=vmem, size = 0x12000, scoped, tag = 'internal scratch']
  %s0 = inlined_call_operand.vmem [shape: f32[2], index: 0, kind: input, shape index: {}]
  %s1 = inlined_call_operand.vmem [shape: bf16[16,128], index: 1, kind: input, shape index: {}]
  %s2 = inlined_call_operand.vmem [shape: bf16[128,128], index: 2, kind: input, shape index: {}]
  %s3 = inlined_call_operand.vmem [shape: bf16[128,128], index: 3, kind: input, shape index: {}]
  %s4 = inlined_call_operand.vmem [shape: f32[2,128], index: 4, kind: input, shape index: {}]
  %s5 = inlined_call_operand.vmem [shape: f32[16,16], index: 5, kind: input, shape index: {}]
  %s6 = inlined_call_operand.vmem [shape: f32[16,16], index: 6, kind: input, shape index: {}]
  %s7 = inlined_call_operand.vmem [shape: f32[16,128], index: 7, kind: output, shape index: {}]
  %s8 = sld [smem:[#allocation0]]
  $region42: #{adaptive_spectral_block.1} parent=0
    _
  %s10 = ssub.s32 1, %s8
  %s11 = scalar_select 0, %s10, %s8
  $region1: #{adaptive_spectral_block.1} parent=0
    #allocation2 [shape = 'u8[512]{0}', space=smem, size = 0x200, scoped, tag = 'input window, operand 0, single buffered']
    #allocation3 [shape = 's32[1]{0}', space=sflag, size = 0x4, scoped, tag = 'scoped memory for adaptive_spectral_block.1']
    %12 = vsyncpa [#allocation3], 0
    // Predicated region
    $region2: #{adaptive_spectral_block.1} parent=1 // pred_check
      _
    $region3: #{adaptive_spectral_block.1} parent=1 // pred_check_branch
      %14 = sbr.rel (0) target = $region5
    $region4: #{adaptive_spectral_block.1} parent=1 // pred_region
      %s16 = ssub.s32 16, 16
      %17 = vsyncadd [#allocation3], %s16
      %s19 = sshll.u32 %s0, 4
      %s20 = int_to_ptr.vmem [resolvable:$true] %s19
      %22 = dma.vmem_to_smem %s20, 16, [#allocation2], [#allocation3]
    $region5: #{adaptive_spectral_block.1} parent=1 // pred_fallthru
      _
    // Predicated region
    $region6: #{adaptive_spectral_block.1} parent=1 // pred_check
      _
    $region7: #{adaptive_spectral_block.1} parent=1 // pred_check_branch
      %24 = sbr.rel (0) target = $region9
    $region8: #{adaptive_spectral_block.1} parent=1 // pred_region
      _
    $region9: #{adaptive_spectral_block.1} parent=1 // pred_fallthru
      _
    // Predicated region
    $region10: #{adaptive_spectral_block.1} parent=1 // pred_check
      _
    $region11: #{adaptive_spectral_block.1} parent=1 // pred_check_branch
      %26 = sbr.rel (0) target = $region13
    $region12: #{adaptive_spectral_block.1} parent=1 // pred_region
      _
    $region13: #{adaptive_spectral_block.1} parent=1 // pred_fallthru
      _
    // Predicated region
    $region14: #{adaptive_spectral_block.1} parent=1 // pred_check
      _
    $region15: #{adaptive_spectral_block.1} parent=1 // pred_check_branch
      %28 = sbr.rel (0) target = $region17
    $region16: #{adaptive_spectral_block.1} parent=1 // pred_region
      _
    $region17: #{adaptive_spectral_block.1} parent=1 // pred_fallthru
      _
    // Predicated region
    $region18: #{adaptive_spectral_block.1} parent=1 // pred_check
      _
    $region19: #{adaptive_spectral_block.1} parent=1 // pred_check_branch
      %30 = sbr.rel (0) target = $region21
    $region20: #{adaptive_spectral_block.1} parent=1 // pred_region
      _
    $region21: #{adaptive_spectral_block.1} parent=1 // pred_fallthru
      _
    // Predicated region
    $region22: #{adaptive_spectral_block.1} parent=1 // pred_check
      _
    $region23: #{adaptive_spectral_block.1} parent=1 // pred_check_branch
      %32 = sbr.rel (0) target = $region25
    $region24: #{adaptive_spectral_block.1} parent=1 // pred_region
      _
    $region25: #{adaptive_spectral_block.1} parent=1 // pred_fallthru
      _
    // Predicated region
    $region26: #{adaptive_spectral_block.1} parent=1 // pred_check
      _
    $region27: #{adaptive_spectral_block.1} parent=1 // pred_check_branch
      %34 = sbr.rel (0) target = $region29
    $region28: #{adaptive_spectral_block.1} parent=1 // pred_region
      _
    $region29: #{adaptive_spectral_block.1} parent=1 // pred_fallthru
      _
    // Predicated region
    $region30: #{adaptive_spectral_block.1} parent=1 // pred_check
      _
    $region31: #{adaptive_spectral_block.1} parent=1 // pred_check_branch
      %36 = sbr.rel (0) target = $region33
    $region32: #{adaptive_spectral_block.1} parent=1 // pred_region
      %37 = dma.done [#allocation3], 16
    $region33: #{adaptive_spectral_block.1} parent=1 // pred_fallthru
      _
    %38 = sfence
    %s40 = sld [smem:[#allocation2]]
    %s41 = sld [smem:[#allocation2 + $0x1]]
    %v42 = vld [vmem:[%s1] sm:$0xf]
    %v43 = vld [vmem:[%s1 + $0x4] sm:$0xf]
    %v44 = vunpack.c.l.bf16 %v42
    %v45 = vunpack.c.l.bf16 %v43
    %v46 = vmul.f32 %v44, %v44
    %v47 = vmul.f32 %v45, %v45
    %48 = vadd.xlane.f32.xlu0 %v46
    %v49 = vpop.xlane.xlu0 %48
    %50 = vadd.xlane.f32.xlu0 %v47
    %v51 = vpop.xlane.xlu0 %50
    %v52 = vld [vmem:[%s4] sm:$0x1]
    %v53 = vlaneseq
    %v54 = vshrl.u32 %v53, 7
    %v55 = vsub.s32 0, %v54
    %v56 = vrot.slane %v52, %v55
    %v57 = vmul.f32 %v44, %v56
    %v58 = vmul.f32 %v45, %v56
    %59 = vadd.xlane.f32.xlu0 %v57
    %v60 = vpop.xlane.xlu0 %59
    %61 = vadd.xlane.f32.xlu0 %v58
    %v62 = vpop.xlane.xlu0 %61
    %v63 = vmul.f32 %v60, %v60
    %v64 = vmul.f32 %v62, %v62
    %v65 = vadd.f32 %v49, %v63
    %v66 = vadd.f32 %v51, %v64
    %v67 = vld [vmem:[%s4 + $0x1] sm:$0x1]
    %v68 = vlaneseq
    %v69 = vshrl.u32 %v68, 7
    %v70 = vsub.s32 0, %v69
    %v71 = vrot.slane %v67, %v70
    %v72 = vmul.f32 %v44, %v71
    %v73 = vmul.f32 %v45, %v71
    %74 = vadd.xlane.f32.xlu0 %v72
    %v75 = vpop.xlane.xlu0 %74
    %76 = vadd.xlane.f32.xlu0 %v73
    %v77 = vpop.xlane.xlu0 %76
    %v78 = vmul.f32 %v75, %v75
    %v79 = vmul.f32 %v77, %v77
    %v80 = vadd.f32 %v65, %v78
    %v81 = vadd.f32 %v66, %v79
    %v82 = vmul.f32 %v80, 0.5
    %v83 = vmul.f32 %v81, 0.5
    %84 = vxpose.xlu0.b32.start [1/16] %v82, 128
    %85 = vxpose.xlu0.b32.cont [2/16] %v83, 128
    %86 = vxpose.xlu0.b32.cont [3/16] 0.0, 128
    %87 = vxpose.xlu0.b32.cont [4/16] 0.0, 128
    %88 = vxpose.xlu0.b32.cont [5/16] 0.0, 128
    %89 = vxpose.xlu0.b32.cont [6/16] 0.0, 128
    %90 = vxpose.xlu0.b32.cont [7/16] 0.0, 128
    %91 = vxpose.xlu0.b32.cont [8/16] 0.0, 128
    %92 = vxpose.xlu0.b32.cont [9/16] 0.0, 128
    %93 = vxpose.xlu0.b32.cont [10/16] 0.0, 128
    %94 = vxpose.xlu0.b32.cont [11/16] 0.0, 128
    %95 = vxpose.xlu0.b32.cont [12/16] 0.0, 128
    %96 = vxpose.xlu0.b32.cont [13/16] 0.0, 128
    %97 = vxpose.xlu0.b32.cont [14/16] 0.0, 128
    %98 = vxpose.xlu0.b32.cont [15/16] 0.0, 128
    %99 = vxpose.xlu0.b32.end [16/16] 0.0, 128
    %v100 = vpop.trf.xlu0
    %v101 = vpop.trf.xlu0
    %v102 = vpop.trf.xlu0
    %v103 = vpop.trf.xlu0
    %v104 = vpop.trf.xlu0
    %v105 = vpop.trf.xlu0
    %v106 = vpop.trf.xlu0
    %v107 = vpop.trf.xlu0
    %v108 = vpop.trf.xlu0
    %v109 = vpop.trf.xlu0
    %v110 = vpop.trf.xlu0
    %v111 = vpop.trf.xlu0
    %v112 = vpop.trf.xlu0
    %v113 = vpop.trf.xlu0
    %v114 = vpop.trf.xlu0
    %v115 = vpop.trf.xlu0
    %v116 = vlaneseq
    %v117 = vshrl.u32 %v116, 7
    %v118 = vsub.s32 0, %v117
    %v119 = vrot.slane %v100, %v118
    %vm120 = vcmp.lt.f32.partialorder %v82, %v119
    %vm121 = vcmp.lt.f32.partialorder %v83, %v119
    %v122 = vsel %vm120, 1, 0
    %v123 = vsel %vm121, 1, 0
    %v124 = vcvt.s32.f32 %v122
    %v125 = vcvt.s32.f32 %v123
    %vm126 = vcmp.eq.f32.partialorder %v82, %v119
    %vm127 = vcmp.eq.f32.partialorder %v83, %v119
    %v128 = vsel %vm126, 1, 0
    %v129 = vsel %vm127, 1, 0
    %v130 = vcvt.s32.f32 %v128
    %v131 = vcvt.s32.f32 %v129
    %v132 = vld [vmem:[%s5] sm:$0xff]
    %v133 = vld [vmem:[%s5 + $0x8] sm:$0xff]
    %v134 = vmul.f32 %v132, %v124
    %v135 = vmul.f32 %v133, %v125
    %v136 = vld [vmem:[%s6] sm:$0xff]
    %v137 = vld [vmem:[%s6 + $0x8] sm:$0xff]
    %v138 = vmul.f32 %v136, %v130
    %v139 = vmul.f32 %v137, %v131
    %v140 = vadd.f32 %v134, %v138
    %v141 = vadd.f32 %v135, %v139
    %vm142 = vcmask 130048
    %v143 = vsel %vm142, %v140, 0.0
    %v144 = vsel %vm142, %v141, 0.0
    %v145 = vadd.f32 %v143, %v144
    %v146 = vrot.slane %v145, 4
    %v147 = vadd.f32 %v145, %v146
    %v148 = vrot.slane %v147, 2
    %v149 = vadd.f32 %v147, %v148
    %v150 = vrot.slane %v149, 1
    %v151 = vadd.f32 %v149, %v150
    %vm152 = vcmp.eq.f32.partialorder %v151, 3.0
    %v153 = vsel %vm152, 1, 0
    %v154 = vcvt.s32.f32 %v153
    %v155 = vmul.f32 %v154, %v100
    %v156 = vlaneseq
    %v157 = vshrl.u32 %v156, 7
    %v158 = vsub.s32 0, %v157
    %v159 = vrot.slane %v155, %v158
    %v160 = vmul.f32 %v132, %v159
    %v161 = vmul.f32 %v133, %v159
    %v162 = vsel %vm142, %v160, 0.0
    %163 = vadd.xlane.f32.xlu0 %v162
    %v164 = vpop.xlane.xlu0 %163
    %v165 = vsel %vm142, %v161, 0.0
    %166 = vadd.xlane.f32.xlu0 %v165
    %v167 = vpop.xlane.xlu0 %166
    %v168 = vadd.f32 %v164, 1e-06
    %v169 = vadd.f32 %v167, 1e-06
    %v170 = vrcp.pop %v168
    %v171 = vmul.f32 %v82, %v170
    %v172 = vrcp.pop %v169
    %v173 = vmul.f32 %v83, %v172
    %v174 = vstv %s40
    %v175 = vsub.f32 %v171, %v174
    %v176 = vsub.f32 %v173, %v174
    %v177 = vstv %s41
    %v178 = vmul.f32 %v175, %v177
    %v179 = vmul.f32 %v176, %v177
    %v180 = vxor.u32 %v178, 2147483648
    %v181 = vxor.u32 %v179, 2147483648
    %v182 = vmul.f32 %v180, 1.442695
    %v183 = vpow.pop %v182
    %v184 = vmul.f32 %v181, 1.442695
    %v185 = vpow.pop %v184
    %v186 = vadd.f32 %v183, 1.0
    %v187 = vadd.f32 %v185, 1.0
    %v188 = vrcp.pop %v186
    %v189 = vmul.f32 1.0, %v188
    %v190 = vrcp.pop %v187
    %v191 = vmul.f32 1.0, %v190
    %v192 = vld [vmem:[%s2] sm:$0xf]
    %v193 = vld [vmem:[%s2 + $0x4] sm:$0xf]
    %v194 = vld [vmem:[%s2 + $0x8] sm:$0xf]
    %v195 = vld [vmem:[%s2 + $0xc] sm:$0xf]
    %v196 = vld [vmem:[%s2 + $0x10] sm:$0xf]
    %v197 = vld [vmem:[%s2 + $0x14] sm:$0xf]
    %v198 = vld [vmem:[%s2 + $0x18] sm:$0xf]
    %v199 = vld [vmem:[%s2 + $0x1c] sm:$0xf]
    %v200 = vld [vmem:[%s2 + $0x20] sm:$0xf]
    %v201 = vld [vmem:[%s2 + $0x24] sm:$0xf]
    %v202 = vld [vmem:[%s2 + $0x28] sm:$0xf]
    %v203 = vld [vmem:[%s2 + $0x2c] sm:$0xf]
    %v204 = vld [vmem:[%s2 + $0x30] sm:$0xf]
    %v205 = vld [vmem:[%s2 + $0x34] sm:$0xf]
    %v206 = vld [vmem:[%s2 + $0x38] sm:$0xf]
    %v207 = vld [vmem:[%s2 + $0x3c] sm:$0xf]
    %v208 = vld [vmem:[%s3] sm:$0xf]
    %v209 = vld [vmem:[%s3 + $0x4] sm:$0xf]
    %v210 = vld [vmem:[%s3 + $0x8] sm:$0xf]
    %v211 = vld [vmem:[%s3 + $0xc] sm:$0xf]
    %v212 = vld [vmem:[%s3 + $0x10] sm:$0xf]
    %v213 = vld [vmem:[%s3 + $0x14] sm:$0xf]
    %v214 = vld [vmem:[%s3 + $0x18] sm:$0xf]
    %v215 = vld [vmem:[%s3 + $0x1c] sm:$0xf]
    %v216 = vld [vmem:[%s3 + $0x20] sm:$0xf]
    %v217 = vld [vmem:[%s3 + $0x24] sm:$0xf]
    %v218 = vld [vmem:[%s3 + $0x28] sm:$0xf]
    %v219 = vld [vmem:[%s3 + $0x2c] sm:$0xf]
    %v220 = vld [vmem:[%s3 + $0x30] sm:$0xf]
    %v221 = vld [vmem:[%s3 + $0x34] sm:$0xf]
    %v222 = vld [vmem:[%s3 + $0x38] sm:$0xf]
    %v223 = vld [vmem:[%s3 + $0x3c] sm:$0xf]
    %v226 = vunpack.c.l.b16 %v42
    %v227 = vunpack.c.l.b16 %v43
    %v228 = vpack.c.b16 %v227, %v226
    %v246 = vunpack.c.l.b16 %v208
    %v247 = vunpack.c.l.b16 %v209
    %v248 = vunpack.c.l.b16 %v210
    %v249 = vunpack.c.l.b16 %v211
    %v250 = vunpack.c.l.b16 %v212
    %v251 = vunpack.c.l.b16 %v213
    %v252 = vunpack.c.l.b16 %v214
    %v253 = vunpack.c.l.b16 %v215
    %v254 = vunpack.c.l.b16 %v216
    %v255 = vunpack.c.l.b16 %v217
    %v256 = vunpack.c.l.b16 %v218
    %v257 = vunpack.c.l.b16 %v219
    %v258 = vunpack.c.l.b16 %v220
    %v259 = vunpack.c.l.b16 %v221
    %v260 = vunpack.c.l.b16 %v222
    %v261 = vunpack.c.l.b16 %v223
    %v262 = vpack.c.b16 %v247, %v246
    %v263 = vpack.c.b16 %v249, %v248
    %v264 = vpack.c.b16 %v251, %v250
    %v265 = vpack.c.b16 %v253, %v252
    %v266 = vpack.c.b16 %v255, %v254
    %v267 = vpack.c.b16 %v257, %v256
    %v268 = vpack.c.b16 %v259, %v258
    %v269 = vpack.c.b16 %v261, %v260
    %278 = vmatprep.subr.bf16.mxu0 0
    %279 = vmatpush1.bf16.msra.mxu0 %v262
    %280 = vmatprep.subr.bf16.mxu0 0
    %281 = vmatpush1.bf16.msra.mxu0 %v263
    %282 = vmatprep.subr.bf16.mxu0 0
    %283 = vmatpush1.bf16.msra.mxu0 %v264
    %284 = vmatprep.subr.bf16.mxu0 0
    %285 = vmatpush1.bf16.msra.mxu0 %v265
    %286 = vmatprep.subr.bf16.mxu0 0
    %287 = vmatpush1.bf16.msra.mxu0 %v266
    %288 = vmatprep.subr.bf16.mxu0 0
    %289 = vmatpush1.bf16.msra.mxu0 %v267
    %290 = vmatprep.subr.bf16.mxu0 0
    %291 = vmatpush1.bf16.msra.mxu0 %v268
    %292 = vmatprep.subr.bf16.mxu0 0
    %293 = vmatpush1.bf16.msra.mxu0 %v269
    %294 = vmatprep.subr.bf16.mxu0 0
    %295 = vmatpush1.bf16.msra.mxu0 0
    %296 = vmatprep.subr.bf16.mxu0 0
    %297 = vmatpush1.bf16.msra.mxu0 0
    %298 = vmatprep.subr.bf16.mxu0 0
    %299 = vmatpush1.bf16.msra.mxu0 0
    %300 = vmatprep.subr.bf16.mxu0 0
    %301 = vmatpush1.bf16.msra.mxu0 0
    %302 = vmatprep.subr.bf16.mxu0 0
    %303 = vmatpush1.bf16.msra.mxu0 0
    %304 = vmatprep.subr.bf16.mxu0 0
    %305 = vmatpush1.bf16.msra.mxu0 0
    %306 = vmatprep.subr.bf16.mxu0 0
    %307 = vmatpush1.bf16.msra.mxu0 0
    %308 = vmatprep.subr.bf16.mxu0 0
    %309 = vmatpush1.bf16.msra.mxu0 0
    %310 = vmatprep.mubr.bf16.mxu0 0
    %311 = vmatmul.mubr.bf16.gmra.mrb[0].mxu0 %v228
    %v312 = vpop.f32.mrb[0].mxu0
    %v313 = vadd.f32 0.0, %v312
    %v314 = vpop.f32.mrb[0].mxu0
    %v315 = vpop.f32.mrb[0].mxu0
    %v316 = vadd.f32 0.0, %v315
    %v317 = vpop.f32.mrb[0].mxu0
    %318 = vdwg.mxu0
    %v319 = vmul.f32 %v189, %v313
    %v320 = vmul.f32 %v191, %v316
    %v337 = vunpack.c.l.b16 %v192
    %v338 = vunpack.c.l.b16 %v193
    %v339 = vunpack.c.l.b16 %v194
    %v340 = vunpack.c.l.b16 %v195
    %v341 = vunpack.c.l.b16 %v196
    %v342 = vunpack.c.l.b16 %v197
    %v343 = vunpack.c.l.b16 %v198
    %v344 = vunpack.c.l.b16 %v199
    %v345 = vunpack.c.l.b16 %v200
    %v346 = vunpack.c.l.b16 %v201
    %v347 = vunpack.c.l.b16 %v202
    %v348 = vunpack.c.l.b16 %v203
    %v349 = vunpack.c.l.b16 %v204
    %v350 = vunpack.c.l.b16 %v205
    %v351 = vunpack.c.l.b16 %v206
    %v352 = vunpack.c.l.b16 %v207
    %v353 = vpack.c.b16 %v338, %v337
    %v354 = vpack.c.b16 %v340, %v339
    %v355 = vpack.c.b16 %v342, %v341
    %v356 = vpack.c.b16 %v344, %v343
    %v357 = vpack.c.b16 %v346, %v345
    %v358 = vpack.c.b16 %v348, %v347
    %v359 = vpack.c.b16 %v350, %v349
    %v360 = vpack.c.b16 %v352, %v351
    %369 = vmatprep.subr.bf16.mxu0 0
    %370 = vmatpush1.bf16.msra.mxu0 %v353
    %371 = vmatprep.subr.bf16.mxu0 0
    %372 = vmatpush1.bf16.msra.mxu0 %v354
    %373 = vmatprep.subr.bf16.mxu0 0
    %374 = vmatpush1.bf16.msra.mxu0 %v355
    %375 = vmatprep.subr.bf16.mxu0 0
    %376 = vmatpush1.bf16.msra.mxu0 %v356
    %377 = vmatprep.subr.bf16.mxu0 0
    %378 = vmatpush1.bf16.msra.mxu0 %v357
    %379 = vmatprep.subr.bf16.mxu0 0
    %380 = vmatpush1.bf16.msra.mxu0 %v358
    %381 = vmatprep.subr.bf16.mxu0 0
    %382 = vmatpush1.bf16.msra.mxu0 %v359
    %383 = vmatprep.subr.bf16.mxu0 0
    %384 = vmatpush1.bf16.msra.mxu0 %v360
    %385 = vmatprep.subr.bf16.mxu0 0
    %386 = vmatpush1.bf16.msra.mxu0 0
    %387 = vmatprep.subr.bf16.mxu0 0
    %388 = vmatpush1.bf16.msra.mxu0 0
    %389 = vmatprep.subr.bf16.mxu0 0
    %390 = vmatpush1.bf16.msra.mxu0 0
    %391 = vmatprep.subr.bf16.mxu0 0
    %392 = vmatpush1.bf16.msra.mxu0 0
    %393 = vmatprep.subr.bf16.mxu0 0
    %394 = vmatpush1.bf16.msra.mxu0 0
    %395 = vmatprep.subr.bf16.mxu0 0
    %396 = vmatpush1.bf16.msra.mxu0 0
    %397 = vmatprep.subr.bf16.mxu0 0
    %398 = vmatpush1.bf16.msra.mxu0 0
    %399 = vmatprep.subr.bf16.mxu0 0
    %400 = vmatpush1.bf16.msra.mxu0 0
    %401 = vmatprep.mubr.bf16.mxu0 0
    %402 = vmatmul.mubr.bf16.gmra.mrb[0].mxu0 %v228
    %v403 = vpop.f32.mrb[0].mxu0
    %v404 = vadd.f32 %v319, %v403
    %v405 = vpop.f32.mrb[0].mxu0
    %v406 = vpop.f32.mrb[0].mxu0
    %v407 = vadd.f32 %v320, %v406
    %v408 = vpop.f32.mrb[0].mxu0
    %409 = vdwg.mxu0
    %410 = vst [vmem:[%s7] sm:$0xff] %v404
    %411 = vst [vmem:[%s7 + $0x8] sm:$0xff] %v407
    // Predicated region
    $region34: #{adaptive_spectral_block.1} parent=1 // pred_check
      _
    $region35: #{adaptive_spectral_block.1} parent=1 // pred_check_branch
      %413 = sbr.rel (0) target = $region37
    $region36: #{adaptive_spectral_block.1} parent=1 // pred_region
      _
    $region37: #{adaptive_spectral_block.1} parent=1 // pred_fallthru
      _
    // Predicated region
    $region38: #{adaptive_spectral_block.1} parent=1 // pred_check
      _
    $region39: #{adaptive_spectral_block.1} parent=1 // pred_check_branch
      %415 = sbr.rel (0) target = $region41
    $region40: #{adaptive_spectral_block.1} parent=1 // pred_region
      _
    $region41: #{adaptive_spectral_block.1} parent=1 // pred_fallthru
      _
    %416 = vsyncpa [#allocation3], 1

</llo_original>
